<compile_context>
chip_gen: v5e
topology: v5e:2x2
jax: 0.10.0
libtpu: 0.0.40
codegen_flags: <defaults>
</compile_context>

<pallas_src>
import jax
import jax.numpy as jnp
from jax.experimental import pallas as pl
from jax.experimental.pallas import tpu as pltpu


NEG_SLOPE = 0.1                 # nn.LeakyReLU(0.1)
DEFAULT_TILE_B = 8192           # rows per grid step
COMPUTE_DTYPE = jnp.bfloat16    # storage/MXU dtype; accumulate + elementwise in f32


def _round_up(x, m):
    return ((x + m - 1) // m) * m


def _choose_tile(batch, tile_b=DEFAULT_TILE_B):
    # Tile must be a multiple of 8 (sublanes) unless it equals the full batch.
    return min(tile_b, _round_up(batch, 8))


# ----------------------------- Pallas kernel -------------------------------

def _mlp_kernel(u_ref, i_ref, w1u_ref, w1i_ref, b1_ref, w2_ref, b2_ref,
                w3_ref, b3_ref, o_ref):
    """Fused: concat + (Linear -> LeakyReLU -> Dropout[eval]) x2 + Linear(->1) + Sigmoid."""
    # --- Layer 1 (concat fused): [u | it] @ W1 == u @ W1[:E] + it @ W1[E:] ---
    h = (jnp.dot(u_ref[...], w1u_ref[...], preferred_element_type=jnp.float32)
         + jnp.dot(i_ref[...], w1i_ref[...], preferred_element_type=jnp.float32)
         + b1_ref[...])
    h = jnp.where(h >= 0.0, h, NEG_SLOPE * h)            # LeakyReLU(0.1) in f32

    # --- Layer 2 ---
    h = jnp.dot(h.astype(w2_ref.dtype), w2_ref[...],
                preferred_element_type=jnp.float32) + b2_ref[...]
    h = jnp.where(h >= 0.0, h, NEG_SLOPE * h)

    # --- Output head: [TILE_B,16] x [16,1] as VPU multiply + lane reduction ---
    logits = jnp.sum(h * w3_ref[...], axis=-1, keepdims=True) + b3_ref[...]

    # Sigmoid: exp on EUP + approximate reciprocal (EUP slot; free in a mem-bound kernel).
    o_ref[...] = pl.reciprocal(1.0 + jnp.exp(-logits), approx=True).astype(o_ref.dtype)


def mlp_forward(u, it, params):
    """u, it: [B, E] gathered embeddings (bf16).  Returns ratings [B, 1] f32."""
    w1u, w1i, b1, w2, b2, w3_row, b3 = params
    B, E = u.shape

    tile_b = _choose_tile(B)
    Bp = _round_up(B, tile_b)
    if Bp != B:   # callers normally pre-pad the (tiny) index vectors instead
        u = jnp.pad(u, ((0, Bp - B), (0, 0)))
        it = jnp.pad(it, ((0, Bp - B), (0, 0)))

    act_spec = pl.BlockSpec((tile_b, E), lambda i: (i, 0))
    out_spec = pl.BlockSpec((tile_b, 1), lambda i: (i, 0))

    # Full-shape blocks with a constant index map -> parameters stay resident in
    # VMEM across all batch tiles (~10 KB total); DMA bandwidth goes to activations.
    def w_spec(arr):
        return pl.BlockSpec(arr.shape, lambda i: (0, 0))

    ratings = pl.pallas_call(
        _mlp_kernel,
        out_shape=jax.ShapeDtypeStruct((Bp, 1), jnp.float32),
        grid=(Bp // tile_b,),
        in_specs=[
            act_spec, act_spec,
            w_spec(w1u), w_spec(w1i), w_spec(b1),
            w_spec(w2), w_spec(b2),
            w_spec(w3_row), w_spec(b3),
        ],
        out_specs=out_spec,
        compiler_params=pltpu.CompilerParams(
            dimension_semantics=("parallel",),   # megacore sharding on v7x
        ),
    )(u, it, w1u, w1i, b1, w2, b2, w3_row, b3)
    return ratings[:B]


# --------------------------- parameter building ----------------------------

def init_params(key, layers):
    """layers: e.g. [64, 32, 16]; final head maps layers[-1] -> 1."""
    dims = list(zip(layers[:-1], layers[1:])) + [(layers[-1], 1)]
    keys = jax.random.split(key, len(dims))
    ws, bs = [], []
    for k, (fi, fo) in zip(keys, dims):
        bound = (6.0 / (fi + fo)) ** 0.5                      # xavier_uniform
        ws.append(jax.random.uniform(k, (fi, fo), jnp.float32, -bound, bound))
        bs.append(jnp.full((1, fo), 0.01, jnp.float32))       # bias.fill_(0.01)
    w1, w2, w3 = ws
    b1, b2, b3 = bs
    E = layers[0] // 2
    # Split W1 so the user/item concat can be fused into two MXU dots.
    w1u = w1[:E].astype(COMPUTE_DTYPE)
    w1i = w1[E:].astype(COMPUTE_DTYPE)
    w2 = w2.astype(COMPUTE_DTYPE)
    w3_row = w3.T.astype(jnp.float32)                         # (1, layers[-1]) for VPU reduce
    return (w1u, w1i, b1, w2, b2, w3_row, b3)


def init_embeddings(key, num_users, num_items, embedding_dim):
    ku, ki = jax.random.split(key)
    # torch.nn.Embedding default init: N(0, 1); stored bf16 to halve HBM traffic.
    emb_user = jax.random.normal(ku, (num_users, embedding_dim), jnp.float32).astype(COMPUTE_DTYPE)
    emb_item = jax.random.normal(ki, (num_items, embedding_dim), jnp.float32).astype(COMPUTE_DTYPE)
    return emb_user, emb_item


# ------------------------------- full model --------------------------------

@jax.jit
def mlp_model(user_indices, item_indices, emb_user, emb_item, *params):
    B = user_indices.shape[0]
    tile_b = _choose_tile(B)
    Bp = _round_up(B, tile_b)
    if Bp != B:
        # Pad the tiny index vectors (not the [B, E] activations) to a tile multiple.
        user_indices = jnp.pad(user_indices, (0, Bp - B))
        item_indices = jnp.pad(item_indices, (0, Bp - B))
    # Embedding lookups stay in XLA (fused gather); concat is fused inside the kernel.
    # TODO(synk): folding the gather into the kernel would need per-row manual DMA /
    # PrefetchScalarGridSpec; not worth it for E=32 tables.
    u = jnp.take(emb_user, user_indices, axis=0)              # [Bp, E] bf16
    it = jnp.take(emb_item, item_indices, axis=0)             # [Bp, E] bf16
    return mlp_forward(u, it, params)[:B]                     # [B, 1] f32


# Pure-JAX reference (mirrors kernel dtype strategy) for a sanity check.
def _reference(user_indices, item_indices, emb_user, emb_item, params):
    w1u, w1i, b1, w2, b2, w3_row, b3 = params
    u = jnp.take(emb_user, user_indices, axis=0)
    it = jnp.take(emb_item, item_indices, axis=0)
    h = (jnp.dot(u, w1u, preferred_element_type=jnp.float32)
         + jnp.dot(it, w1i, preferred_element_type=jnp.float32) + b1)
    h = jnp.where(h >= 0.0, h, NEG_SLOPE * h)
    h = jnp.dot(h.astype(w2.dtype), w2, preferred_element_type=jnp.float32) + b2
    h = jnp.where(h >= 0.0, h, NEG_SLOPE * h)
    logits = jnp.sum(h * w3_row, axis=-1, keepdims=True) + b3
    return jax.nn.sigmoid(logits)


if __name__ == "__main__":
    # Small config consistent with the module: embedding_dim=32 -> layers[0]=64
    num_users, num_items = 10, 20
    embedding_dim = 32
    layers = [64, 32, 16]
    batch = 8

    root = jax.random.PRNGKey(0)
    k_emb, k_par, k_u, k_i = jax.random.split(root, 4)

    emb_user, emb_item = init_embeddings(k_emb, num_users, num_items, embedding_dim)
    params = init_params(k_par, layers)

    user_idx = jax.random.randint(k_u, (batch,), 0, num_users, dtype=jnp.int32)
    item_idx = jax.random.randint(k_i, (batch,), 0, num_items, dtype=jnp.int32)

    rating = mlp_model(user_idx, item_idx, emb_user, emb_item, *params)
    rating = jax.block_until_ready(rating)

    assert rating.shape == (batch, 1)
    # approx reciprocal may land a hair outside [0, 1]; allow a small tolerance.
    assert bool(jnp.all((rating >= -1e-3) & (rating <= 1.0 + 1e-3)))

    ref = _reference(user_idx, item_idx, emb_user, emb_item, params)
    assert bool(jnp.all(jnp.abs(rating - ref) < 2e-2)), "kernel/reference mismatch"

    # TODO(synk): Dropout(0.5) is identity here (eval-mode forward); training-mode
    # stochastic masking would need pltpu.prng_random_bits inside the kernel.
    print("KERNEL_OK")
</pallas_src>

<mosaic_0001>
module attributes {stable_mosaic.version = 11 : i64} {
  func.func @_mlp_kernel(%arg0: i32, %arg1: memref<8x32xbf16, #tpu.memory_space<vmem>>, %arg2: memref<8x32xbf16, #tpu.memory_space<vmem>>, %arg3: memref<32x32xbf16, #tpu.memory_space<vmem>>, %arg4: memref<32x32xbf16, #tpu.memory_space<vmem>>, %arg5: memref<1x32xf32, #tpu.memory_space<vmem>>, %arg6: memref<32x16xbf16, #tpu.memory_space<vmem>>, %arg7: memref<1x16xf32, #tpu.memory_space<vmem>>, %arg8: memref<1x16xf32, #tpu.memory_space<vmem>>, %arg9: memref<1x1xf32, #tpu.memory_space<vmem>>, %arg10: memref<8x1xf32, #tpu.memory_space<vmem>>) attributes {dimension_semantics = [#tpu.dimension_semantics<parallel>], iteration_bounds = array<i64: 1>, scalar_prefetch = 0 : i64, scratch_operands = 0 : i64, tpu.core_type = #tpu.core_type<tc>, window_params = [{transform_indices = @transform_0, window_bounds = array<i64: 8, 32>}, {transform_indices = @transform_1, window_bounds = array<i64: 8, 32>}, {pipeline_mode = #tpu.pipeline_mode<synchronous>, transform_indices = @transform_2, window_bounds = array<i64: 32, 32>}, {pipeline_mode = #tpu.pipeline_mode<synchronous>, transform_indices = @transform_3, window_bounds = array<i64: 32, 32>}, {pipeline_mode = #tpu.pipeline_mode<synchronous>, transform_indices = @transform_4, window_bounds = array<i64: 1, 32>}, {pipeline_mode = #tpu.pipeline_mode<synchronous>, transform_indices = @transform_5, window_bounds = array<i64: 32, 16>}, {pipeline_mode = #tpu.pipeline_mode<synchronous>, transform_indices = @transform_6, window_bounds = array<i64: 1, 16>}, {pipeline_mode = #tpu.pipeline_mode<synchronous>, transform_indices = @transform_7, window_bounds = array<i64: 1, 16>}, {pipeline_mode = #tpu.pipeline_mode<synchronous>, transform_indices = @transform_8, window_bounds = array<i64: 1, 1>}, {transform_indices = @transform_9, window_bounds = array<i64: 8, 1>}]} {
    %c0 = arith.constant 0 : index
    %c0_0 = arith.constant 0 : index
    %0 = vector.load %arg1[%c0, %c0_0] : memref<8x32xbf16, #tpu.memory_space<vmem>>, vector<8x32xbf16>
    %c0_1 = arith.constant 0 : index
    %c0_2 = arith.constant 0 : index
    %1 = vector.load %arg3[%c0_1, %c0_2] : memref<32x32xbf16, #tpu.memory_space<vmem>>, vector<32x32xbf16>
    %cst = arith.constant dense<0.000000e+00> : vector<8x32xf32>
    %2 = tpu.matmul %0, %1, %cst {dimension_numbers = #tpu.dot_dimension_numbers<[1], [0], [0], [1], [0, 0, 1, 1], [], []>} : vector<8x32xbf16>, vector<32x32xbf16>, vector<8x32xf32> -> vector<8x32xf32>
    %c0_3 = arith.constant 0 : index
    %c0_4 = arith.constant 0 : index
    %3 = vector.load %arg2[%c0_3, %c0_4] : memref<8x32xbf16, #tpu.memory_space<vmem>>, vector<8x32xbf16>
    %c0_5 = arith.constant 0 : index
    %c0_6 = arith.constant 0 : index
    %4 = vector.load %arg4[%c0_5, %c0_6] : memref<32x32xbf16, #tpu.memory_space<vmem>>, vector<32x32xbf16>
    %cst_7 = arith.constant dense<0.000000e+00> : vector<8x32xf32>
    %5 = tpu.matmul %3, %4, %cst_7 {dimension_numbers = #tpu.dot_dimension_numbers<[1], [0], [0], [1], [0, 0, 1, 1], [], []>} : vector<8x32xbf16>, vector<32x32xbf16>, vector<8x32xf32> -> vector<8x32xf32>
    %6 = arith.addf %2, %5 : vector<8x32xf32>
    %c0_8 = arith.constant 0 : index
    %c0_9 = arith.constant 0 : index
    %7 = vector.load %arg5[%c0_8, %c0_9] : memref<1x32xf32, #tpu.memory_space<vmem>>, vector<1x32xf32>
    %8 = vector.broadcast %7 : vector<1x32xf32> to vector<8x32xf32>
    %9 = arith.addf %6, %8 : vector<8x32xf32>
    %cst_10 = arith.constant 0.000000e+00 : f32
    %10 = vector.broadcast %cst_10 : f32 to vector<8x32xf32>
    %11 = arith.cmpf oge, %9, %10 : vector<8x32xf32>
    %cst_11 = arith.constant 1.000000e-01 : f32
    %12 = vector.broadcast %cst_11 : f32 to vector<8x32xf32>
    %13 = arith.mulf %12, %9 : vector<8x32xf32>
    %14 = arith.select %11, %9, %13 : vector<8x32xi1>, vector<8x32xf32>
    %15 = arith.truncf %14 : vector<8x32xf32> to vector<8x32xbf16>
    %c0_12 = arith.constant 0 : index
    %c0_13 = arith.constant 0 : index
    %16 = vector.load %arg6[%c0_12, %c0_13] : memref<32x16xbf16, #tpu.memory_space<vmem>>, vector<32x16xbf16>
    %cst_14 = arith.constant dense<0.000000e+00> : vector<8x16xf32>
    %17 = tpu.matmul %15, %16, %cst_14 {dimension_numbers = #tpu.dot_dimension_numbers<[1], [0], [0], [1], [0, 0, 1, 1], [], []>} : vector<8x32xbf16>, vector<32x16xbf16>, vector<8x16xf32> -> vector<8x16xf32>
    %c0_15 = arith.constant 0 : index
    %c0_16 = arith.constant 0 : index
    %18 = vector.load %arg7[%c0_15, %c0_16] : memref<1x16xf32, #tpu.memory_space<vmem>>, vector<1x16xf32>
    %19 = vector.broadcast %18 : vector<1x16xf32> to vector<8x16xf32>
    %20 = arith.addf %17, %19 : vector<8x16xf32>
    %cst_17 = arith.constant 0.000000e+00 : f32
    %21 = vector.broadcast %cst_17 : f32 to vector<8x16xf32>
    %22 = arith.cmpf oge, %20, %21 : vector<8x16xf32>
    %cst_18 = arith.constant 1.000000e-01 : f32
    %23 = vector.broadcast %cst_18 : f32 to vector<8x16xf32>
    %24 = arith.mulf %23, %20 : vector<8x16xf32>
    %25 = arith.select %22, %20, %24 : vector<8x16xi1>, vector<8x16xf32>
    %c0_19 = arith.constant 0 : index
    %c0_20 = arith.constant 0 : index
    %26 = vector.load %arg8[%c0_19, %c0_20] : memref<1x16xf32, #tpu.memory_space<vmem>>, vector<1x16xf32>
    %27 = vector.broadcast %26 : vector<1x16xf32> to vector<8x16xf32>
    %28 = arith.mulf %25, %27 : vector<8x16xf32>
    %cst_21 = arith.constant dense<0.000000e+00> : vector<8xf32>
    %29 = vector.multi_reduction <add>, %28, %cst_21 [1] : vector<8x16xf32> to vector<8xf32>
    %30 = vector.shape_cast %29 : vector<8xf32> to vector<8x1xf32>
    %c0_22 = arith.constant 0 : index
    %c0_23 = arith.constant 0 : index
    %31 = vector.load %arg9[%c0_22, %c0_23] : memref<1x1xf32, #tpu.memory_space<vmem>>, vector<1x1xf32>
    %32 = vector.broadcast %31 : vector<1x1xf32> to vector<8x1xf32>
    %33 = arith.addf %30, %32 : vector<8x1xf32>
    %cst_24 = arith.constant 0.000000e+00 : f32
    %34 = vector.broadcast %cst_24 : f32 to vector<8x1xf32>
    %35 = arith.subf %34, %33 : vector<8x1xf32>
    %36 = math.exp %35 : vector<8x1xf32>
    %cst_25 = arith.constant 1.000000e+00 : f32
    %37 = vector.broadcast %cst_25 : f32 to vector<8x1xf32>
    %38 = arith.addf %37, %36 : vector<8x1xf32>
    %39 = tpu.reciprocal %38 {approx = true} : vector<8x1xf32> -> vector<8x1xf32>
    %c0_26 = arith.constant 0 : index
    %c0_27 = arith.constant 0 : index
    %40 = vector.load %arg10[%c0_26, %c0_27] : memref<8x1xf32, #tpu.memory_space<vmem>>, vector<8x1xf32>
    tpu.vector_store %arg10[%c0_26, %c0_27], %39 {strides = array<i32>} : memref<8x1xf32, #tpu.memory_space<vmem>>, vector<8x1xf32>,
    return
  }
  func.func @transform_0(%arg0: i32) -> (i32, i32) {
    %c0_i32 = arith.constant 0 : i32
    %c0_i32_0 = arith.constant 0 : i32
    return %arg0, %c0_i32 : i32, i32
  }
  func.func @transform_1(%arg0: i32) -> (i32, i32) {
    %c0_i32 = arith.constant 0 : i32
    %c0_i32_0 = arith.constant 0 : i32
    return %arg0, %c0_i32 : i32, i32
  }
  func.func @transform_2(%arg0: i32) -> (i32, i32) {
    %c0_i32 = arith.constant 0 : i32
    %c0_i32_0 = arith.constant 0 : i32
    %c0_i32_1 = arith.constant 0 : i32
    return %c0_i32, %c0_i32_0 : i32, i32
  }
  func.func @transform_3(%arg0: i32) -> (i32, i32) {
    %c0_i32 = arith.constant 0 : i32
    %c0_i32_0 = arith.constant 0 : i32
    %c0_i32_1 = arith.constant 0 : i32
    return %c0_i32, %c0_i32_0 : i32, i32
  }
  func.func @transform_4(%arg0: i32) -> (i32, i32) {
    %c0_i32 = arith.constant 0 : i32
    %c0_i32_0 = arith.constant 0 : i32
    %c0_i32_1 = arith.constant 0 : i32
    return %c0_i32, %c0_i32_0 : i32, i32
  }
  func.func @transform_5(%arg0: i32) -> (i32, i32) {
    %c0_i32 = arith.constant 0 : i32
    %c0_i32_0 = arith.constant 0 : i32
    %c0_i32_1 = arith.constant 0 : i32
    return %c0_i32, %c0_i32_0 : i32, i32
  }
  func.func @transform_6(%arg0: i32) -> (i32, i32) {
    %c0_i32 = arith.constant 0 : i32
    %c0_i32_0 = arith.constant 0 : i32
    %c0_i32_1 = arith.constant 0 : i32
    return %c0_i32, %c0_i32_0 : i32, i32
  }
  func.func @transform_7(%arg0: i32) -> (i32, i32) {
    %c0_i32 = arith.constant 0 : i32
    %c0_i32_0 = arith.constant 0 : i32
    %c0_i32_1 = arith.constant 0 : i32
    return %c0_i32, %c0_i32_0 : i32, i32
  }
  func.func @transform_8(%arg0: i32) -> (i32, i32) {
    %c0_i32 = arith.constant 0 : i32
    %c0_i32_0 = arith.constant 0 : i32
    %c0_i32_1 = arith.constant 0 : i32
    return %c0_i32, %c0_i32_0 : i32, i32
  }
  func.func @transform_9(%arg0: i32) -> (i32, i32) {
    %c0_i32 = arith.constant 0 : i32
    %c0_i32_0 = arith.constant 0 : i32
    return %arg0, %c0_i32 : i32, i32
  }
}

</mosaic_0001>

<llo_original>
// kernel: mlp_model.1
$region0: #{mlp_model.1}
  #allocation0 [shape = 'u32[]', space=smem, size = 0x4, offset = 0x4, fixed_abs, tag = 'smem constant byte address 0x4 - core index']
  #allocation1 [shape = 'u32[72,128]{1,0:T(1,128)}', space=vmem, size = 0x9000, scoped, tag = 'internal scratch']
  #allocation2 [shape = 'f32[1,1]{1,0:T(1,128)S(1)}', space=vmem, size = 0x200, scoped, tag = 'scoped memory for mlp_model.1']
  %s0 = inlined_call_operand.vmem [shape: bf16[8,32], index: 0, kind: input, shape index: {}]
  %s1 = inlined_call_operand.vmem [shape: bf16[8,32], index: 1, kind: input, shape index: {}]
  %s2 = inlined_call_operand.vmem [shape: bf16[32,32], index: 2, kind: input, shape index: {}]
  %s3 = inlined_call_operand.vmem [shape: bf16[32,32], index: 3, kind: input, shape index: {}]
  %s4 = inlined_call_operand.vmem [shape: f32[1,32], index: 4, kind: input, shape index: {}]
  %s5 = inlined_call_operand.vmem [shape: bf16[32,16], index: 5, kind: input, shape index: {}]
  %s6 = inlined_call_operand.vmem [shape: f32[1,16], index: 6, kind: input, shape index: {}]
  %s7 = inlined_call_operand.vmem [shape: f32[1,16], index: 7, kind: input, shape index: {}]
  %s8 = inlined_call_operand.<no memory space> [shape: f32[1,1], index: 8, kind: input, shape index: {}]
  %s9 = inlined_call_operand.vmem [shape: f32[8,1], index: 9, kind: output, shape index: {}]
  %s10 = sld [smem:[#allocation0]]
  $region46: #{mlp_model.1} parent=0
    _
  %s12 = ssub.s32 1, %s10
  %s13 = scalar_select 0, %s12, %s10
  %v14 = vstv %s8
  %15 = vst [vmem:[#allocation2] sm:$0x1] %v14
  // Predicated region
  $region2: #{mlp_model.1} parent=0 // pred_check
    _
  $region3: #{mlp_model.1} parent=0 // pred_check_branch
    %17 = sbr.rel (0) target = $region5
  $region4: #{mlp_model.1} parent=0 // pred_region
    _
  $region5: #{mlp_model.1} parent=0 // pred_fallthru
    _
  // Predicated region
  $region6: #{mlp_model.1} parent=0 // pred_check
    _
  $region7: #{mlp_model.1} parent=0 // pred_check_branch
    %19 = sbr.rel (0) target = $region9
  $region8: #{mlp_model.1} parent=0 // pred_region
    _
  $region9: #{mlp_model.1} parent=0 // pred_fallthru
    _
  // Predicated region
  $region10: #{mlp_model.1} parent=0 // pred_check
    _
  $region11: #{mlp_model.1} parent=0 // pred_check_branch
    %21 = sbr.rel (0) target = $region13
  $region12: #{mlp_model.1} parent=0 // pred_region
    _
  $region13: #{mlp_model.1} parent=0 // pred_fallthru
    _
  // Predicated region
  $region14: #{mlp_model.1} parent=0 // pred_check
    _
  $region15: #{mlp_model.1} parent=0 // pred_check_branch
    %23 = sbr.rel (0) target = $region17
  $region16: #{mlp_model.1} parent=0 // pred_region
    _
  $region17: #{mlp_model.1} parent=0 // pred_fallthru
    _
  // Predicated region
  $region18: #{mlp_model.1} parent=0 // pred_check
    _
  $region19: #{mlp_model.1} parent=0 // pred_check_branch
    %25 = sbr.rel (0) target = $region21
  $region20: #{mlp_model.1} parent=0 // pred_region
    _
  $region21: #{mlp_model.1} parent=0 // pred_fallthru
    _
  // Predicated region
  $region22: #{mlp_model.1} parent=0 // pred_check
    _
  $region23: #{mlp_model.1} parent=0 // pred_check_branch
    %27 = sbr.rel (0) target = $region25
  $region24: #{mlp_model.1} parent=0 // pred_region
    _
  $region25: #{mlp_model.1} parent=0 // pred_fallthru
    _
  // Predicated region
  $region26: #{mlp_model.1} parent=0 // pred_check
    _
  $region27: #{mlp_model.1} parent=0 // pred_check_branch
    %29 = sbr.rel (0) target = $region29
  $region28: #{mlp_model.1} parent=0 // pred_region
    _
  $region29: #{mlp_model.1} parent=0 // pred_fallthru
    _
  // Predicated region
  $region30: #{mlp_model.1} parent=0 // pred_check
    _
  $region31: #{mlp_model.1} parent=0 // pred_check_branch
    %31 = sbr.rel (0) target = $region33
  $region32: #{mlp_model.1} parent=0 // pred_region
    _
  $region33: #{mlp_model.1} parent=0 // pred_fallthru
    _
  // Predicated region
  $region34: #{mlp_model.1} parent=0 // pred_check
    _
  $region35: #{mlp_model.1} parent=0 // pred_check_branch
    %33 = sbr.rel (0) target = $region37
  $region36: #{mlp_model.1} parent=0 // pred_region
    _
  $region37: #{mlp_model.1} parent=0 // pred_fallthru
    _
  %v35 = vld [vmem:[%s0] sm:$0xf]
  %v36 = vld [vmem:[%s2] sm:$0xf]
  %v37 = vld [vmem:[%s2 + $0x4] sm:$0xf]
  %v38 = vld [vmem:[%s2 + $0x8] sm:$0xf]
  %v39 = vld [vmem:[%s2 + $0xc] sm:$0xf]
  %v40 = vld [vmem:[%s1] sm:$0xf]
  %v41 = vld [vmem:[%s3] sm:$0xf]
  %v42 = vld [vmem:[%s3 + $0x4] sm:$0xf]
  %v43 = vld [vmem:[%s3 + $0x8] sm:$0xf]
  %v44 = vld [vmem:[%s3 + $0xc] sm:$0xf]
  %v49 = vunpack.c.l.b16 %v41
  %v50 = vunpack.c.l.b16 %v42
  %v51 = vunpack.c.l.b16 %v43
  %v52 = vunpack.c.l.b16 %v44
  %v53 = vpack.c.b16 %v50, %v49
  %v54 = vpack.c.b16 %v52, %v51
  %vm57 = vcmask 261120
  %v59 = vsel %vm57, %v40, 0
  %61 = vmatpush.bf16.msra.mxu0 0
  %62 = vmatpush.bf16.msra.mxu0 0
  %63 = vmatpush.bf16.msra.mxu0 0
  %64 = vmatpush.bf16.msra.mxu0 0
  %65 = vmatpush.bf16.msra.mxu0 0
  %66 = vmatpush.bf16.msra.mxu0 0
  %67 = vmatpush.bf16.msra.mxu0 %v54
  %68 = vmatpush.bf16.msra.mxu0 %v53
  %69 = vmatmul.bf16.gmra.mxu0 %v59
  %v70 = vpop.f32.mrf.mxu0
  %v71 = vadd.f32 0.0, %v70
  %v72 = vpop.f32.mrf.mxu0
  %73 = vdwg.mxu0
  %v78 = vunpack.c.l.b16 %v36
  %v79 = vunpack.c.l.b16 %v37
  %v80 = vunpack.c.l.b16 %v38
  %v81 = vunpack.c.l.b16 %v39
  %v82 = vpack.c.b16 %v79, %v78
  %v83 = vpack.c.b16 %v81, %v80
  %v87 = vsel %vm57, %v35, 0
  %89 = vmatpush.bf16.msra.mxu0 0
  %90 = vmatpush.bf16.msra.mxu0 0
  %91 = vmatpush.bf16.msra.mxu0 0
  %92 = vmatpush.bf16.msra.mxu0 0
  %93 = vmatpush.bf16.msra.mxu0 0
  %94 = vmatpush.bf16.msra.mxu0 0
  %95 = vmatpush.bf16.msra.mxu0 %v83
  %96 = vmatpush.bf16.msra.mxu0 %v82
  %97 = vmatmul.bf16.gmra.mxu0 %v87
  %v98 = vpop.f32.mrf.mxu0
  %v99 = vadd.f32 %v71, %v98
  %v100 = vpop.f32.mrf.mxu0
  %101 = vdwg.mxu0
  %v102 = vld [vmem:[%s4] sm:$0x1]
  %v104 = vperm.slane %v102, 0
  %v106 = vadd.f32 %v99, %v104
  %vm107 = vcmp.ge.f32.partialorder %v106, 0.0
  %v108 = vmul.f32 %v106, 0.1
  %v109 = vsel %vm107, %v106, %v108
  %v110 = vpack.c.bf16 %v109, %v109
  %v111 = vld [vmem:[%s5] sm:$0xf]
  %v112 = vld [vmem:[%s5 + $0x4] sm:$0xf]
  %v113 = vld [vmem:[%s5 + $0x8] sm:$0xf]
  %v114 = vld [vmem:[%s5 + $0xc] sm:$0xf]
  %v115 = vld [vmem:[%s6] sm:$0x1]
  %v117 = vperm.slane %v115, 0
  %v123 = vunpack.c.l.b16 %v111
  %v124 = vunpack.c.l.b16 %v112
  %v125 = vunpack.c.l.b16 %v113
  %v126 = vunpack.c.l.b16 %v114
  %v127 = vpack.c.b16 %v124, %v123
  %v128 = vpack.c.b16 %v126, %v125
  %v132 = vsel %vm57, %v110, 0
  %134 = vmatpush.bf16.msra.mxu0 0
  %135 = vmatpush.bf16.msra.mxu0 0
  %136 = vmatpush.bf16.msra.mxu0 0
  %137 = vmatpush.bf16.msra.mxu0 0
  %138 = vmatpush.bf16.msra.mxu0 0
  %139 = vmatpush.bf16.msra.mxu0 0
  %140 = vmatpush.bf16.msra.mxu0 %v128
  %141 = vmatpush.bf16.msra.mxu0 %v127
  %142 = vmatmul.bf16.gmra.mxu0 %v132
  %v143 = vpop.f32.mrf.mxu0
  %v144 = vadd.f32 %v117, %v143
  %v145 = vpop.f32.mrf.mxu0
  %146 = vdwg.mxu0
  %vm147 = vcmp.ge.f32.partialorder %v144, 0.0
  %v148 = vmul.f32 %v144, 0.1
  %v149 = vsel %vm147, %v144, %v148
  %v150 = vld [vmem:[%s7] sm:$0x1]
  %v152 = vperm.slane %v150, 0
  %v154 = vmul.f32 %v149, %v152
  %vm155 = vcmask 130048
  %v156 = vsel %vm155, %v154, 0.0
  %157 = vadd.xlane.f32.xlu0 %v156
  %v158 = vpop.xlane.xlu0 %157
  %v159 = vld [vmem:[#allocation2] sm:$0x1]
  %v161 = vperm.slane %v159, 0
  %v163 = vadd.f32 %v158, %v161
  %v164 = vsub.f32 0.0, %v163
  %v165 = vmul.f32 %v164, 1.442695
  %v166 = vpow.pop %v165
  %v167 = vadd.f32 %v166, 1.0
  %v168 = vrcp.pop %v167
  %vm169 = vcmask 7168
  %170 = vst.msk [vmem:[%s9] sm:$0xff] %vm169, %v168
  // Predicated region
  $region38: #{mlp_model.1} parent=0 // pred_check
    _
  $region39: #{mlp_model.1} parent=0 // pred_check_branch
    %172 = sbr.rel (0) target = $region41
  $region40: #{mlp_model.1} parent=0 // pred_region
    _
  $region41: #{mlp_model.1} parent=0 // pred_fallthru
    _
  // Predicated region
  $region42: #{mlp_model.1} parent=0 // pred_check
    _
  $region43: #{mlp_model.1} parent=0 // pred_check_branch
    %174 = sbr.rel (0) target = $region45
  $region44: #{mlp_model.1} parent=0 // pred_region
    _
  $region45: #{mlp_model.1} parent=0 // pred_fallthru
    _

</llo_original>
